<compile_context>
chip_gen: v6e
topology: v6e:2x2x1
jax: 0.10.0
libtpu: 0.0.40
codegen_flags: <defaults>
</compile_context>

<pallas_src>
import functools
from math import gcd

import numpy as np
import jax
import jax.numpy as jnp
from jax import lax
from jax.experimental import pallas as pl
from jax.experimental.pallas import tpu as pltpu


def _round_up(v, m):
    return (v + m - 1) // m * m


def _postres_kernel(x_ref, w1_ref, g1_ref, b1_ref, w2_ref, g2_ref, b2_ref,
                    wd_ref, gd_ref, bd_ref, out_ref,
                    *, h, w, cin, cout, cin_p, cout_p, groups, eps, act):
    hw = h * w
    f32 = jnp.float32

    # ---- activation: (1, cin, hw) f32 -> channel-padded (cin_p, hw) --------
    # Zero-padding to a sublane multiple happens ONLY here, in VMEM.
    x = x_ref[...].reshape(cin, hw)
    if cin_p > cin:
        x = jnp.concatenate([x, jnp.zeros((cin_p - cin, hw), f32)], axis=0)

    # ---- boundary masks of the 9 conv taps (built once, shared by convs) ---
    pidx = lax.broadcasted_iota(jnp.int32, (1, hw), 1)
    if (w & (w - 1)) == 0:
        col = jnp.bitwise_and(pidx, w - 1)
    else:
        col = pidx % w

    def _tap_mask(dy, dx):
        conds = []
        if dy == -1:
            conds.append(pidx >= w)
        elif dy == 1:
            conds.append(pidx < hw - w)
        if dx == -1:
            conds.append(col >= 1)
        elif dx == 1:
            conds.append(col < w - 1)
        if not conds:
            return None
        m = conds[0]
        for c in conds[1:]:
            m = jnp.logical_and(m, c)
        return m.astype(f32)

    masks = {(dy, dx): _tap_mask(dy, dx)
             for dy in (-1, 0, 1) for dx in (-1, 0, 1)}

    def conv3x3(a, w_ref_):
        """3x3 'same' conv. a: (c_p, hw) f32, w_ref_: (cout_p, k_pad) bf16."""
        c_p = a.shape[0]
        k_pad = w_ref_.shape[1]
        taps = []
        for dy in (-1, 0, 1):
            for dx in (-1, 0, 1):
                s = dy * w + dx                       # flat lane shift
                t = a if s == 0 else pltpu.roll(a, shift=(-s) % hw, axis=1)
                m = masks[(dy, dx)]
                if m is not None:
                    t = t * m                         # zero out-of-image taps
                taps.append(t)
        if k_pad > 9 * c_p:                           # pad K to lane multiple
            taps.append(jnp.zeros((k_pad - 9 * c_p, hw), f32))
        x9 = jnp.concatenate(taps, axis=0).astype(jnp.bfloat16)  # (k_pad, hw)
        return jnp.dot(w_ref_[...], x9, preferred_element_type=f32)

    # ---- GroupNorm (stats over the hw lane axis, per channel/group) --------
    cg = cout // groups
    if cg > 1:
        # channel<->group aggregation matrix, built once per invocation.
        ci = lax.broadcasted_iota(jnp.int32, (cout_p, cout_p), 0)
        cj = lax.broadcasted_iota(jnp.int32, (cout_p, cout_p), 1)
        amat = jnp.logical_and(ci // cg == cj // cg,
                               jnp.logical_and(ci < cout, cj < cout)).astype(f32)
        inv_cnt = 1.0 / (hw * cg)
    else:
        amat, inv_cnt = None, 1.0 / hw

    def gnorm(y, g_ref, b_ref):
        s = jnp.sum(y, axis=1, keepdims=True)                     # (cout_p, 1)
        if amat is not None:
            s = jnp.dot(amat, s, preferred_element_type=f32)
        mean = s * inv_cnt
        d = y - mean
        v = jnp.sum(d * d, axis=1, keepdims=True)                 # two-pass var
        if amat is not None:
            v = jnp.dot(amat, v, preferred_element_type=f32)
        scale = g_ref[...] * lax.rsqrt(v * inv_cnt + eps)
        return d * scale + b_ref[...]

    # conv1 -> GN -> ReLU                (f32 accumulation / vector math)
    h1 = jnp.maximum(gnorm(conv3x3(x, w1_ref), g1_ref, b1_ref), 0.0)
    # conv2 -> GN
    h2 = gnorm(conv3x3(h1, w2_ref), g2_ref, b2_ref)
    # downsample residual: 1x1 conv (f32, tiny) -> GN
    res = gnorm(jnp.dot(wd_ref[...], x, preferred_element_type=f32),
                gd_ref, bd_ref)

    out = h2 + res
    if act:
        out = jnp.maximum(out, 0.0)
    out_ref[...] = out[:cout].reshape(out_ref.shape).astype(out_ref.dtype)


def postres_forward(x_nchw, params, *, groups, eps=1e-5, act=True):
    """Fused PostRes forward.  x_nchw: (N, Cin, H, W) f32 (NCHW, as in torch)."""
    w1, g1, b1, w2, g2, b2, wd, gd, bd = params
    n, cin, hgt, wid = x_nchw.shape
    cout = w1.shape[-1]
    if cin == cout:
        # TODO(synk): identity-shortcut variant not implemented.
        raise NotImplementedError("PostRes identity-shortcut variant not implemented")
    hw = hgt * wid
    if hw % 128 != 0:
        # TODO(synk): support non-128-multiple spatial extents (lane masking).
        raise NotImplementedError("H*W must be a multiple of 128")

    cin_p = _round_up(cin, 8)
    cout_p = _round_up(cout, 8)
    k1 = _round_up(9 * cin_p, 128)
    k2 = _round_up(9 * cout_p, 128)

    # NCHW -> (N, C, H*W): pure reshape, no HBM transpose/pad/cast pass.
    x = x_nchw.reshape(n, cin, hw).astype(jnp.float32)

    def pack3x3(wk, ci_p, kpad):
        # (3,3,ci,co) HWIO -> (cout_p, kpad) bf16, K layout: tap k*ci_p + i.
        ci, co = wk.shape[2], wk.shape[3]
        w_ = jnp.transpose(wk, (3, 0, 1, 2))                 # (co, 3, 3, ci)
        w_ = jnp.pad(w_, ((0, cout_p - co), (0, 0), (0, 0), (0, ci_p - ci)))
        w_ = w_.reshape(cout_p, 9 * ci_p)
        return jnp.pad(w_, ((0, 0), (0, kpad - 9 * ci_p))).astype(jnp.bfloat16)

    def pack_vec(v):                                         # gamma/beta -> (cout_p, 1)
        return jnp.pad(v.reshape(-1, 1), ((0, cout_p - cout), (0, 0))).astype(jnp.float32)

    w1p = pack3x3(w1, cin_p, k1)
    w2p = pack3x3(w2, cout_p, k2)
    wdp = jnp.pad(jnp.transpose(wd),
                  ((0, cout_p - cout), (0, cin_p - cin))).astype(jnp.float32)
    g1p, b1p, g2p, b2p, gdp, bdp = map(pack_vec, (g1, b1, g2, b2, gd, bd))

    kernel = functools.partial(_postres_kernel, h=hgt, w=wid, cin=cin, cout=cout,
                               cin_p=cin_p, cout_p=cout_p, groups=groups,
                               eps=eps, act=act)

    def whole(a):                      # whole-array (grid-invariant) spec
        return pl.BlockSpec(a.shape, lambda i, _nd=a.ndim: (0,) * _nd)

    # Advisory cost from REAL channel counts.
    flops = 2 * n * hw * cout * (9 * cin + 9 * cout + cin)
    transcend = 3 * n * cout
    bytes_accessed = (n * cin * hw * 4 + n * cout * hw * 4
                      + (9 * cin * cout + 9 * cout * cout) * 2
                      + cin * cout * 4 + 6 * cout * 4)

    # VMEM budget from actual block sizes (double-buffered I/O + weights +
    # in-kernel temporaries), with headroom; never hard-coded to the ceiling.
    blk_bytes = (cin * hw + cout * hw) * 4
    w_bytes = (w1p.size + w2p.size) * 2 + wdp.size * 4 + 6 * cout_p * 4
    work_bytes = (k1 + k2) * hw * 4 + 16 * cout_p * hw * 4
    vmem_limit = int(min(max(2 * blk_bytes + w_bytes + work_bytes + (1 << 20),
                             4 << 20), 100 << 20))

    out_flat = pl.pallas_call(
        kernel,
        grid=(n,),
        out_shape=jax.ShapeDtypeStruct((n, cout, hw), jnp.float32),
        in_specs=[
            pl.BlockSpec((1, cin, hw), lambda i: (i, 0, 0)),
            whole(w1p), whole(g1p), whole(b1p),
            whole(w2p), whole(g2p), whole(b2p),
            whole(wdp), whole(gdp), whole(bdp),
        ],
        out_specs=pl.BlockSpec((1, cout, hw), lambda i: (i, 0, 0)),
        compiler_params=pltpu.CompilerParams(
            dimension_semantics=("parallel",),
            vmem_limit_bytes=vmem_limit),
        cost_estimate=pl.CostEstimate(flops=flops,
                                      transcendentals=transcend,
                                      bytes_accessed=bytes_accessed),
    )(x, w1p, g1p, b1p, w2p, g2p, b2p, wdp, gdp, bdp)

    return out_flat.reshape(n, cout, hgt, wid)     # free reshape back to NCHW


def ref_forward(x_nchw, params, *, groups, eps=1e-5, act=True):
    """Pure-JAX f32 reference (mirrors the PyTorch forward) for a sanity check."""
    w1, g1, b1, w2, g2, b2, wd, gd, bd = params
    x = jnp.transpose(x_nchw, (0, 2, 3, 1)).astype(jnp.float32)
    dn = ('NHWC', 'HWIO', 'NHWC')

    def gn(y, gamma, beta):
        n_, h_, w_, c_ = y.shape
        cg = c_ // groups
        yg = y.reshape(n_, h_, w_, groups, cg)
        mean = jnp.mean(yg, axis=(1, 2, 4), keepdims=True)
        var = jnp.mean((yg - mean) ** 2, axis=(1, 2, 4), keepdims=True)
        yn = ((yg - mean) / jnp.sqrt(var + eps)).reshape(n_, h_, w_, c_)
        return yn * gamma.reshape(1, 1, 1, c_) + beta.reshape(1, 1, 1, c_)

    out = lax.conv_general_dilated(x, w1, (1, 1), 'SAME', dimension_numbers=dn)
    out = jax.nn.relu(gn(out, g1, b1))
    out = lax.conv_general_dilated(out, w2, (1, 1), 'SAME', dimension_numbers=dn)
    out = gn(out, g2, b2)
    res = gn(jnp.einsum('nhwc,co->nhwo', x, wd), gd, bd)
    out = out + res
    if act:
        out = jax.nn.relu(out)
    return jnp.transpose(out, (0, 3, 1, 2))


if __name__ == "__main__":
    N, CIN, COUT, H, W = 2, 4, 8, 16, 16
    NG = 32
    groups = gcd(NG, COUT)   # = 8 -> channels-per-group == 1

    key = jax.random.PRNGKey(0)
    ks = jax.random.split(key, 10)
    w1 = 0.1 * jax.random.normal(ks[0], (3, 3, CIN, COUT), jnp.float32)   # HWIO
    g1 = 1.0 + 0.1 * jax.random.normal(ks[1], (COUT,), jnp.float32)
    b1 = 0.1 * jax.random.normal(ks[2], (COUT,), jnp.float32)
    w2 = 0.1 * jax.random.normal(ks[3], (3, 3, COUT, COUT), jnp.float32)
    g2 = 1.0 + 0.1 * jax.random.normal(ks[4], (COUT,), jnp.float32)
    b2 = 0.1 * jax.random.normal(ks[5], (COUT,), jnp.float32)
    wd = 0.1 * jax.random.normal(ks[6], (CIN, COUT), jnp.float32)         # 1x1 conv
    gd = 1.0 + 0.1 * jax.random.normal(ks[7], (COUT,), jnp.float32)
    bd = 0.1 * jax.random.normal(ks[8], (COUT,), jnp.float32)
    x = jax.random.normal(ks[9], (N, CIN, H, W), jnp.float32)             # NCHW

    params = (w1, g1, b1, w2, g2, b2, wd, gd, bd)
    fwd = jax.jit(functools.partial(postres_forward, groups=groups))
    out = fwd(x, params)
    jax.block_until_ready(out)
    assert out.shape == (N, COUT, H, W)

    ref = ref_forward(x, params, groups=groups)
    # bf16 MXU operands in the conv matmuls vs. a pure-f32 reference -> loose check.
    np.testing.assert_allclose(np.asarray(out), np.asarray(ref),
                               atol=5e-2, rtol=5e-2)
    print("KERNEL_OK")
</pallas_src>

<mosaic_0001>
module attributes {stable_mosaic.version = 11 : i64} {
  func.func @_postres_kernel(%arg0: i32, %arg1: memref<1x4x256xf32, #tpu.memory_space<vmem>>, %arg2: memref<8x128xbf16, #tpu.memory_space<vmem>>, %arg3: memref<8x1xf32, #tpu.memory_space<vmem>>, %arg4: memref<8x1xf32, #tpu.memory_space<vmem>>, %arg5: memref<8x128xbf16, #tpu.memory_space<vmem>>, %arg6: memref<8x1xf32, #tpu.memory_space<vmem>>, %arg7: memref<8x1xf32, #tpu.memory_space<vmem>>, %arg8: memref<8x8xf32, #tpu.memory_space<vmem>>, %arg9: memref<8x1xf32, #tpu.memory_space<vmem>>, %arg10: memref<8x1xf32, #tpu.memory_space<vmem>>, %arg11: memref<1x8x256xf32, #tpu.memory_space<vmem>>) attributes {dimension_semantics = [#tpu.dimension_semantics<parallel>], iteration_bounds = array<i64: 2>, scalar_prefetch = 0 : i64, scratch_operands = 0 : i64, tpu.core_type = #tpu.core_type<tc>, window_params = [{transform_indices = @transform_0, window_bounds = array<i64: 1, 4, 256>}, {pipeline_mode = #tpu.pipeline_mode<synchronous>, transform_indices = @transform_1, window_bounds = array<i64: 8, 128>}, {pipeline_mode = #tpu.pipeline_mode<synchronous>, transform_indices = @transform_2, window_bounds = array<i64: 8, 1>}, {pipeline_mode = #tpu.pipeline_mode<synchronous>, transform_indices = @transform_3, window_bounds = array<i64: 8, 1>}, {pipeline_mode = #tpu.pipeline_mode<synchronous>, transform_indices = @transform_4, window_bounds = array<i64: 8, 128>}, {pipeline_mode = #tpu.pipeline_mode<synchronous>, transform_indices = @transform_5, window_bounds = array<i64: 8, 1>}, {pipeline_mode = #tpu.pipeline_mode<synchronous>, transform_indices = @transform_6, window_bounds = array<i64: 8, 1>}, {pipeline_mode = #tpu.pipeline_mode<synchronous>, transform_indices = @transform_7, window_bounds = array<i64: 8, 8>}, {pipeline_mode = #tpu.pipeline_mode<synchronous>, transform_indices = @transform_8, window_bounds = array<i64: 8, 1>}, {pipeline_mode = #tpu.pipeline_mode<synchronous>, transform_indices = @transform_9, window_bounds = array<i64: 8, 1>}, {transform_indices = @transform_10, window_bounds = array<i64: 1, 8, 256>}]} {
    %c0 = arith.constant 0 : index
    %c0_0 = arith.constant 0 : index
    %c0_1 = arith.constant 0 : index
    %0 = vector.load %arg1[%c0, %c0_0, %c0_1] : memref<1x4x256xf32, #tpu.memory_space<vmem>>, vector<1x4x256xf32>
    %1 = vector.shape_cast %0 : vector<1x4x256xf32> to vector<4x256xf32>
    %cst = arith.constant 0.000000e+00 : f32
    %2 = vector.broadcast %cst : f32 to vector<4x256xf32>
    %3 = tpu.concatenate %1, %2 in 0 : vector<4x256xf32>, vector<4x256xf32> -> vector<8x256xf32>
    %4 = tpu.iota {dimensions = array<i32: 1>} : vector<1x256xi32>
    %c15_i32 = arith.constant 15 : i32
    %5 = vector.broadcast %c15_i32 : i32 to vector<1x256xi32>
    %6 = arith.andi %4, %5 : vector<1x256xi32>
    %c16_i32 = arith.constant 16 : i32
    %7 = vector.broadcast %c16_i32 : i32 to vector<1x256xi32>
    %8 = arith.cmpi sge, %4, %7 : vector<1x256xi32>
    %c1_i32 = arith.constant 1 : i32
    %9 = vector.broadcast %c1_i32 : i32 to vector<1x256xi32>
    %10 = arith.cmpi sge, %6, %9 : vector<1x256xi32>
    %11 = arith.andi %8, %10 : vector<1x256xi1>
    %12 = arith.extui %11 : vector<1x256xi1> to vector<1x256xi32>
    %13 = arith.sitofp %12 : vector<1x256xi32> to vector<1x256xf32>
    %c16_i32_2 = arith.constant 16 : i32
    %14 = vector.broadcast %c16_i32_2 : i32 to vector<1x256xi32>
    %15 = arith.cmpi sge, %4, %14 : vector<1x256xi32>
    %16 = arith.extui %15 : vector<1x256xi1> to vector<1x256xi32>
    %17 = arith.sitofp %16 : vector<1x256xi32> to vector<1x256xf32>
    %c16_i32_3 = arith.constant 16 : i32
    %18 = vector.broadcast %c16_i32_3 : i32 to vector<1x256xi32>
    %19 = arith.cmpi sge, %4, %18 : vector<1x256xi32>
    %c15_i32_4 = arith.constant 15 : i32
    %20 = vector.broadcast %c15_i32_4 : i32 to vector<1x256xi32>
    %21 = arith.cmpi slt, %6, %20 : vector<1x256xi32>
    %22 = arith.andi %19, %21 : vector<1x256xi1>
    %23 = arith.extui %22 : vector<1x256xi1> to vector<1x256xi32>
    %24 = arith.sitofp %23 : vector<1x256xi32> to vector<1x256xf32>
    %c1_i32_5 = arith.constant 1 : i32
    %25 = vector.broadcast %c1_i32_5 : i32 to vector<1x256xi32>
    %26 = arith.cmpi sge, %6, %25 : vector<1x256xi32>
    %27 = arith.extui %26 : vector<1x256xi1> to vector<1x256xi32>
    %28 = arith.sitofp %27 : vector<1x256xi32> to vector<1x256xf32>
    %c15_i32_6 = arith.constant 15 : i32
    %29 = vector.broadcast %c15_i32_6 : i32 to vector<1x256xi32>
    %30 = arith.cmpi slt, %6, %29 : vector<1x256xi32>
    %31 = arith.extui %30 : vector<1x256xi1> to vector<1x256xi32>
    %32 = arith.sitofp %31 : vector<1x256xi32> to vector<1x256xf32>
    %c240_i32 = arith.constant 240 : i32
    %33 = vector.broadcast %c240_i32 : i32 to vector<1x256xi32>
    %34 = arith.cmpi slt, %4, %33 : vector<1x256xi32>
    %c1_i32_7 = arith.constant 1 : i32
    %35 = vector.broadcast %c1_i32_7 : i32 to vector<1x256xi32>
    %36 = arith.cmpi sge, %6, %35 : vector<1x256xi32>
    %37 = arith.andi %34, %36 : vector<1x256xi1>
    %38 = arith.extui %37 : vector<1x256xi1> to vector<1x256xi32>
    %39 = arith.sitofp %38 : vector<1x256xi32> to vector<1x256xf32>
    %c240_i32_8 = arith.constant 240 : i32
    %40 = vector.broadcast %c240_i32_8 : i32 to vector<1x256xi32>
    %41 = arith.cmpi slt, %4, %40 : vector<1x256xi32>
    %42 = arith.extui %41 : vector<1x256xi1> to vector<1x256xi32>
    %43 = arith.sitofp %42 : vector<1x256xi32> to vector<1x256xf32>
    %c240_i32_9 = arith.constant 240 : i32
    %44 = vector.broadcast %c240_i32_9 : i32 to vector<1x256xi32>
    %45 = arith.cmpi slt, %4, %44 : vector<1x256xi32>
    %c15_i32_10 = arith.constant 15 : i32
    %46 = vector.broadcast %c15_i32_10 : i32 to vector<1x256xi32>
    %47 = arith.cmpi slt, %6, %46 : vector<1x256xi32>
    %48 = arith.andi %45, %47 : vector<1x256xi1>
    %49 = arith.extui %48 : vector<1x256xi1> to vector<1x256xi32>
    %50 = arith.sitofp %49 : vector<1x256xi32> to vector<1x256xf32>
    %c17_i32 = arith.constant 17 : i32
    %51 = tpu.dynamic_rotate %3 by %c17_i32 dim 1 : vector<8x256xf32>, i32 -> vector<8x256xf32>
    %52 = vector.broadcast %13 : vector<1x256xf32> to vector<8x256xf32>
    %53 = arith.mulf %51, %52 : vector<8x256xf32>
    %c16_i32_11 = arith.constant 16 : i32
    %54 = tpu.dynamic_rotate %3 by %c16_i32_11 dim 1 : vector<8x256xf32>, i32 -> vector<8x256xf32>
    %55 = vector.broadcast %17 : vector<1x256xf32> to vector<8x256xf32>
    %56 = arith.mulf %54, %55 : vector<8x256xf32>
    %c15_i32_12 = arith.constant 15 : i32
    %57 = tpu.dynamic_rotate %3 by %c15_i32_12 dim 1 : vector<8x256xf32>, i32 -> vector<8x256xf32>
    %58 = vector.broadcast %24 : vector<1x256xf32> to vector<8x256xf32>
    %59 = arith.mulf %57, %58 : vector<8x256xf32>
    %c1_i32_13 = arith.constant 1 : i32
    %60 = tpu.dynamic_rotate %3 by %c1_i32_13 dim 1 : vector<8x256xf32>, i32 -> vector<8x256xf32>
    %61 = vector.broadcast %28 : vector<1x256xf32> to vector<8x256xf32>
    %62 = arith.mulf %60, %61 : vector<8x256xf32>
    %c255_i32 = arith.constant 255 : i32
    %63 = tpu.dynamic_rotate %3 by %c255_i32 dim 1 : vector<8x256xf32>, i32 -> vector<8x256xf32>
    %64 = vector.broadcast %32 : vector<1x256xf32> to vector<8x256xf32>
    %65 = arith.mulf %63, %64 : vector<8x256xf32>
    %c241_i32 = arith.constant 241 : i32
    %66 = tpu.dynamic_rotate %3 by %c241_i32 dim 1 : vector<8x256xf32>, i32 -> vector<8x256xf32>
    %67 = vector.broadcast %39 : vector<1x256xf32> to vector<8x256xf32>
    %68 = arith.mulf %66, %67 : vector<8x256xf32>
    %c240_i32_14 = arith.constant 240 : i32
    %69 = tpu.dynamic_rotate %3 by %c240_i32_14 dim 1 : vector<8x256xf32>, i32 -> vector<8x256xf32>
    %70 = vector.broadcast %43 : vector<1x256xf32> to vector<8x256xf32>
    %71 = arith.mulf %69, %70 : vector<8x256xf32>
    %c239_i32 = arith.constant 239 : i32
    %72 = tpu.dynamic_rotate %3 by %c239_i32 dim 1 : vector<8x256xf32>, i32 -> vector<8x256xf32>
    %73 = vector.broadcast %50 : vector<1x256xf32> to vector<8x256xf32>
    %74 = arith.mulf %72, %73 : vector<8x256xf32>
    %cst_15 = arith.constant 0.000000e+00 : f32
    %75 = vector.broadcast %cst_15 : f32 to vector<56x256xf32>
    %76 = tpu.concatenate %53, %56, %59, %62, %3, %65, %68, %71, %74, %75 in 0 : vector<8x256xf32>, vector<8x256xf32>, vector<8x256xf32>, vector<8x256xf32>, vector<8x256xf32>, vector<8x256xf32>, vector<8x256xf32>, vector<8x256xf32>, vector<8x256xf32>, vector<56x256xf32> -> vector<128x256xf32>
    %77 = arith.truncf %76 : vector<128x256xf32> to vector<128x256xbf16>
    %c0_16 = arith.constant 0 : index
    %c0_17 = arith.constant 0 : index
    %78 = vector.load %arg2[%c0_16, %c0_17] : memref<8x128xbf16, #tpu.memory_space<vmem>>, vector<8x128xbf16>
    %cst_18 = arith.constant dense<0.000000e+00> : vector<8x256xf32>
    %79 = tpu.matmul %78, %77, %cst_18 {dimension_numbers = #tpu.dot_dimension_numbers<[1], [0], [0], [1], [0, 0, 1, 1], [], []>} : vector<8x128xbf16>, vector<128x256xbf16>, vector<8x256xf32> -> vector<8x256xf32>
    %cst_19 = arith.constant dense<0.000000e+00> : vector<8xf32>
    %80 = vector.multi_reduction <add>, %79, %cst_19 [1] : vector<8x256xf32> to vector<8xf32>
    %81 = vector.shape_cast %80 : vector<8xf32> to vector<8x1xf32>
    %cst_20 = arith.constant 3.906250e-03 : f32
    %82 = vector.broadcast %cst_20 : f32 to vector<8x1xf32>
    %83 = arith.mulf %81, %82 : vector<8x1xf32>
    %84 = vector.broadcast %83 : vector<8x1xf32> to vector<8x256xf32>
    %85 = arith.subf %79, %84 : vector<8x256xf32>
    %86 = arith.mulf %85, %85 : vector<8x256xf32>
    %cst_21 = arith.constant dense<0.000000e+00> : vector<8xf32>
    %87 = vector.multi_reduction <add>, %86, %cst_21 [1] : vector<8x256xf32> to vector<8xf32>
    %88 = vector.shape_cast %87 : vector<8xf32> to vector<8x1xf32>
    %c0_22 = arith.constant 0 : index
    %c0_23 = arith.constant 0 : index
    %89 = vector.load %arg3[%c0_22, %c0_23] : memref<8x1xf32, #tpu.memory_space<vmem>>, vector<8x1xf32>
    %cst_24 = arith.constant 3.906250e-03 : f32
    %90 = vector.broadcast %cst_24 : f32 to vector<8x1xf32>
    %91 = arith.mulf %88, %90 : vector<8x1xf32>
    %cst_25 = arith.constant 9.99999974E-6 : f32
    %92 = vector.broadcast %cst_25 : f32 to vector<8x1xf32>
    %93 = arith.addf %91, %92 : vector<8x1xf32>
    %94 = math.rsqrt %93 : vector<8x1xf32>
    %95 = arith.mulf %89, %94 : vector<8x1xf32>
    %96 = vector.broadcast %95 : vector<8x1xf32> to vector<8x256xf32>
    %97 = arith.mulf %85, %96 : vector<8x256xf32>
    %c0_26 = arith.constant 0 : index
    %c0_27 = arith.constant 0 : index
    %98 = vector.load %arg4[%c0_26, %c0_27] : memref<8x1xf32, #tpu.memory_space<vmem>>, vector<8x1xf32>
    %99 = vector.broadcast %98 : vector<8x1xf32> to vector<8x256xf32>
    %100 = arith.addf %97, %99 : vector<8x256xf32>
    %cst_28 = arith.constant 0.000000e+00 : f32
    %101 = vector.broadcast %cst_28 : f32 to vector<8x256xf32>
    %102 = arith.maximumf %100, %101 : vector<8x256xf32>
    %c17_i32_29 = arith.constant 17 : i32
    %103 = tpu.dynamic_rotate %102 by %c17_i32_29 dim 1 : vector<8x256xf32>, i32 -> vector<8x256xf32>
    %104 = vector.broadcast %13 : vector<1x256xf32> to vector<8x256xf32>
    %105 = arith.mulf %103, %104 : vector<8x256xf32>
    %c16_i32_30 = arith.constant 16 : i32
    %106 = tpu.dynamic_rotate %102 by %c16_i32_30 dim 1 : vector<8x256xf32>, i32 -> vector<8x256xf32>
    %107 = vector.broadcast %17 : vector<1x256xf32> to vector<8x256xf32>
    %108 = arith.mulf %106, %107 : vector<8x256xf32>
    %c15_i32_31 = arith.constant 15 : i32
    %109 = tpu.dynamic_rotate %102 by %c15_i32_31 dim 1 : vector<8x256xf32>, i32 -> vector<8x256xf32>
    %110 = vector.broadcast %24 : vector<1x256xf32> to vector<8x256xf32>
    %111 = arith.mulf %109, %110 : vector<8x256xf32>
    %c1_i32_32 = arith.constant 1 : i32
    %112 = tpu.dynamic_rotate %102 by %c1_i32_32 dim 1 : vector<8x256xf32>, i32 -> vector<8x256xf32>
    %113 = vector.broadcast %28 : vector<1x256xf32> to vector<8x256xf32>
    %114 = arith.mulf %112, %113 : vector<8x256xf32>
    %c255_i32_33 = arith.constant 255 : i32
    %115 = tpu.dynamic_rotate %102 by %c255_i32_33 dim 1 : vector<8x256xf32>, i32 -> vector<8x256xf32>
    %116 = vector.broadcast %32 : vector<1x256xf32> to vector<8x256xf32>
    %117 = arith.mulf %115, %116 : vector<8x256xf32>
    %c241_i32_34 = arith.constant 241 : i32
    %118 = tpu.dynamic_rotate %102 by %c241_i32_34 dim 1 : vector<8x256xf32>, i32 -> vector<8x256xf32>
    %119 = vector.broadcast %39 : vector<1x256xf32> to vector<8x256xf32>
    %120 = arith.mulf %118, %119 : vector<8x256xf32>
    %c240_i32_35 = arith.constant 240 : i32
    %121 = tpu.dynamic_rotate %102 by %c240_i32_35 dim 1 : vector<8x256xf32>, i32 -> vector<8x256xf32>
    %122 = vector.broadcast %43 : vector<1x256xf32> to vector<8x256xf32>
    %123 = arith.mulf %121, %122 : vector<8x256xf32>
    %c239_i32_36 = arith.constant 239 : i32
    %124 = tpu.dynamic_rotate %102 by %c239_i32_36 dim 1 : vector<8x256xf32>, i32 -> vector<8x256xf32>
    %125 = vector.broadcast %50 : vector<1x256xf32> to vector<8x256xf32>
    %126 = arith.mulf %124, %125 : vector<8x256xf32>
    %cst_37 = arith.constant 0.000000e+00 : f32
    %127 = vector.broadcast %cst_37 : f32 to vector<56x256xf32>
    %128 = tpu.concatenate %105, %108, %111, %114, %102, %117, %120, %123, %126, %127 in 0 : vector<8x256xf32>, vector<8x256xf32>, vector<8x256xf32>, vector<8x256xf32>, vector<8x256xf32>, vector<8x256xf32>, vector<8x256xf32>, vector<8x256xf32>, vector<8x256xf32>, vector<56x256xf32> -> vector<128x256xf32>
    %129 = arith.truncf %128 : vector<128x256xf32> to vector<128x256xbf16>
    %c0_38 = arith.constant 0 : index
    %c0_39 = arith.constant 0 : index
    %130 = vector.load %arg5[%c0_38, %c0_39] : memref<8x128xbf16, #tpu.memory_space<vmem>>, vector<8x128xbf16>
    %cst_40 = arith.constant dense<0.000000e+00> : vector<8x256xf32>
    %131 = tpu.matmul %130, %129, %cst_40 {dimension_numbers = #tpu.dot_dimension_numbers<[1], [0], [0], [1], [0, 0, 1, 1], [], []>} : vector<8x128xbf16>, vector<128x256xbf16>, vector<8x256xf32> -> vector<8x256xf32>
    %cst_41 = arith.constant dense<0.000000e+00> : vector<8xf32>
    %132 = vector.multi_reduction <add>, %131, %cst_41 [1] : vector<8x256xf32> to vector<8xf32>
    %133 = vector.shape_cast %132 : vector<8xf32> to vector<8x1xf32>
    %cst_42 = arith.constant 3.906250e-03 : f32
    %134 = vector.broadcast %cst_42 : f32 to vector<8x1xf32>
    %135 = arith.mulf %133, %134 : vector<8x1xf32>
    %136 = vector.broadcast %135 : vector<8x1xf32> to vector<8x256xf32>
    %137 = arith.subf %131, %136 : vector<8x256xf32>
    %138 = arith.mulf %137, %137 : vector<8x256xf32>
    %cst_43 = arith.constant dense<0.000000e+00> : vector<8xf32>
    %139 = vector.multi_reduction <add>, %138, %cst_43 [1] : vector<8x256xf32> to vector<8xf32>
    %140 = vector.shape_cast %139 : vector<8xf32> to vector<8x1xf32>
    %c0_44 = arith.constant 0 : index
    %c0_45 = arith.constant 0 : index
    %141 = vector.load %arg6[%c0_44, %c0_45] : memref<8x1xf32, #tpu.memory_space<vmem>>, vector<8x1xf32>
    %cst_46 = arith.constant 3.906250e-03 : f32
    %142 = vector.broadcast %cst_46 : f32 to vector<8x1xf32>
    %143 = arith.mulf %140, %142 : vector<8x1xf32>
    %cst_47 = arith.constant 9.99999974E-6 : f32
    %144 = vector.broadcast %cst_47 : f32 to vector<8x1xf32>
    %145 = arith.addf %143, %144 : vector<8x1xf32>
    %146 = math.rsqrt %145 : vector<8x1xf32>
    %147 = arith.mulf %141, %146 : vector<8x1xf32>
    %148 = vector.broadcast %147 : vector<8x1xf32> to vector<8x256xf32>
    %149 = arith.mulf %137, %148 : vector<8x256xf32>
    %c0_48 = arith.constant 0 : index
    %c0_49 = arith.constant 0 : index
    %150 = vector.load %arg7[%c0_48, %c0_49] : memref<8x1xf32, #tpu.memory_space<vmem>>, vector<8x1xf32>
    %151 = vector.broadcast %150 : vector<8x1xf32> to vector<8x256xf32>
    %152 = arith.addf %149, %151 : vector<8x256xf32>
    %c0_50 = arith.constant 0 : index
    %c0_51 = arith.constant 0 : index
    %153 = vector.load %arg8[%c0_50, %c0_51] : memref<8x8xf32, #tpu.memory_space<vmem>>, vector<8x8xf32>
    %cst_52 = arith.constant dense<0.000000e+00> : vector<8x256xf32>
    %154 = tpu.matmul %153, %3, %cst_52 {dimension_numbers = #tpu.dot_dimension_numbers<[1], [0], [0], [1], [0, 0, 1, 1], [], []>} : vector<8x8xf32>, vector<8x256xf32>, vector<8x256xf32> -> vector<8x256xf32>
    %cst_53 = arith.constant dense<0.000000e+00> : vector<8xf32>
    %155 = vector.multi_reduction <add>, %154, %cst_53 [1] : vector<8x256xf32> to vector<8xf32>
    %156 = vector.shape_cast %155 : vector<8xf32> to vector<8x1xf32>
    %cst_54 = arith.constant 3.906250e-03 : f32
    %157 = vector.broadcast %cst_54 : f32 to vector<8x1xf32>
    %158 = arith.mulf %156, %157 : vector<8x1xf32>
    %159 = vector.broadcast %158 : vector<8x1xf32> to vector<8x256xf32>
    %160 = arith.subf %154, %159 : vector<8x256xf32>
    %161 = arith.mulf %160, %160 : vector<8x256xf32>
    %cst_55 = arith.constant dense<0.000000e+00> : vector<8xf32>
    %162 = vector.multi_reduction <add>, %161, %cst_55 [1] : vector<8x256xf32> to vector<8xf32>
    %163 = vector.shape_cast %162 : vector<8xf32> to vector<8x1xf32>
    %c0_56 = arith.constant 0 : index
    %c0_57 = arith.constant 0 : index
    %164 = vector.load %arg9[%c0_56, %c0_57] : memref<8x1xf32, #tpu.memory_space<vmem>>, vector<8x1xf32>
    %cst_58 = arith.constant 3.906250e-03 : f32
    %165 = vector.broadcast %cst_58 : f32 to vector<8x1xf32>
    %166 = arith.mulf %163, %165 : vector<8x1xf32>
    %cst_59 = arith.constant 9.99999974E-6 : f32
    %167 = vector.broadcast %cst_59 : f32 to vector<8x1xf32>
    %168 = arith.addf %166, %167 : vector<8x1xf32>
    %169 = math.rsqrt %168 : vector<8x1xf32>
    %170 = arith.mulf %164, %169 : vector<8x1xf32>
    %171 = vector.broadcast %170 : vector<8x1xf32> to vector<8x256xf32>
    %172 = arith.mulf %160, %171 : vector<8x256xf32>
    %c0_60 = arith.constant 0 : index
    %c0_61 = arith.constant 0 : index
    %173 = vector.load %arg10[%c0_60, %c0_61] : memref<8x1xf32, #tpu.memory_space<vmem>>, vector<8x1xf32>
    %174 = vector.broadcast %173 : vector<8x1xf32> to vector<8x256xf32>
    %175 = arith.addf %172, %174 : vector<8x256xf32>
    %176 = arith.addf %152, %175 : vector<8x256xf32>
    %cst_62 = arith.constant 0.000000e+00 : f32
    %177 = vector.broadcast %cst_62 : f32 to vector<8x256xf32>
    %178 = arith.maximumf %176, %177 : vector<8x256xf32>
    %179 = vector.shape_cast %178 : vector<8x256xf32> to vector<1x8x256xf32>
    %c0_63 = arith.constant 0 : index
    %c0_64 = arith.constant 0 : index
    %c0_65 = arith.constant 0 : index
    %180 = vector.load %arg11[%c0_63, %c0_64, %c0_65] : memref<1x8x256xf32, #tpu.memory_space<vmem>>, vector<1x8x256xf32>
    tpu.vector_store %arg11[%c0_63, %c0_64, %c0_65], %179 {strides = array<i32>} : memref<1x8x256xf32, #tpu.memory_space<vmem>>, vector<1x8x256xf32>,
    return
  }
  func.func @transform_0(%arg0: i32) -> (i32, i32, i32) {
    %c0_i32 = arith.constant 0 : i32
    %c0_i32_0 = arith.constant 0 : i32
    %c0_i32_1 = arith.constant 0 : i32
    return %arg0, %c0_i32, %c0_i32_0 : i32, i32, i32
  }
  func.func @transform_1(%arg0: i32) -> (i32, i32) {
    %c0_i32 = arith.constant 0 : i32
    %c0_i32_0 = arith.constant 0 : i32
    %c0_i32_1 = arith.constant 0 : i32
    return %c0_i32, %c0_i32_0 : i32, i32
  }
  func.func @transform_2(%arg0: i32) -> (i32, i32) {
    %c0_i32 = arith.constant 0 : i32
    %c0_i32_0 = arith.constant 0 : i32
    %c0_i32_1 = arith.constant 0 : i32
    return %c0_i32, %c0_i32_0 : i32, i32
  }
  func.func @transform_3(%arg0: i32) -> (i32, i32) {
    %c0_i32 = arith.constant 0 : i32
    %c0_i32_0 = arith.constant 0 : i32
    %c0_i32_1 = arith.constant 0 : i32
    return %c0_i32, %c0_i32_0 : i32, i32
  }
  func.func @transform_4(%arg0: i32) -> (i32, i32) {
    %c0_i32 = arith.constant 0 : i32
    %c0_i32_0 = arith.constant 0 : i32
    %c0_i32_1 = arith.constant 0 : i32
    return %c0_i32, %c0_i32_0 : i32, i32
  }
  func.func @transform_5(%arg0: i32) -> (i32, i32) {
    %c0_i32 = arith.constant 0 : i32
    %c0_i32_0 = arith.constant 0 : i32
    %c0_i32_1 = arith.constant 0 : i32
    return %c0_i32, %c0_i32_0 : i32, i32
  }
  func.func @transform_6(%arg0: i32) -> (i32, i32) {
    %c0_i32 = arith.constant 0 : i32
    %c0_i32_0 = arith.constant 0 : i32
    %c0_i32_1 = arith.constant 0 : i32
    return %c0_i32, %c0_i32_0 : i32, i32
  }
  func.func @transform_7(%arg0: i32) -> (i32, i32) {
    %c0_i32 = arith.constant 0 : i32
    %c0_i32_0 = arith.constant 0 : i32
    %c0_i32_1 = arith.constant 0 : i32
    return %c0_i32, %c0_i32_0 : i32, i32
  }
  func.func @transform_8(%arg0: i32) -> (i32, i32) {
    %c0_i32 = arith.constant 0 : i32
    %c0_i32_0 = arith.constant 0 : i32
    %c0_i32_1 = arith.constant 0 : i32
    return %c0_i32, %c0_i32_0 : i32, i32
  }
  func.func @transform_9(%arg0: i32) -> (i32, i32) {
    %c0_i32 = arith.constant 0 : i32
    %c0_i32_0 = arith.constant 0 : i32
    %c0_i32_1 = arith.constant 0 : i32
    return %c0_i32, %c0_i32_0 : i32, i32
  }
  func.func @transform_10(%arg0: i32) -> (i32, i32, i32) {
    %c0_i32 = arith.constant 0 : i32
    %c0_i32_0 = arith.constant 0 : i32
    %c0_i32_1 = arith.constant 0 : i32
    return %arg0, %c0_i32, %c0_i32_0 : i32, i32, i32
  }
}

</mosaic_0001>

<llo_original>
// kernel: postres_forward.1
$region0: #{postres_forward.1}
  #allocation0 [shape = 'u32[]', space=smem, size = 0x4, offset = 0x4, fixed_abs, tag = 'smem constant byte address 0x4 - core index']
  #allocation1 [shape = 'u32[144,128]{1,0:T(1,128)}', space=vmem, size = 0x12000, scoped, tag = 'internal scratch']
  %s0 = inlined_call_operand.vmem [shape: f32[2,4,256], index: 0, kind: input, shape index: {}]
  %s1 = inlined_call_operand.vmem [shape: bf16[8,128], index: 1, kind: input, shape index: {}]
  %s2 = inlined_call_operand.vmem [shape: f32[8,1], index: 2, kind: input, shape index: {}]
  %s3 = inlined_call_operand.vmem [shape: f32[8,1], index: 3, kind: input, shape index: {}]
  %s4 = inlined_call_operand.vmem [shape: bf16[8,128], index: 4, kind: input, shape index: {}]
  %s5 = inlined_call_operand.vmem [shape: f32[8,1], index: 5, kind: input, shape index: {}]
  %s6 = inlined_call_operand.vmem [shape: f32[8,1], index: 6, kind: input, shape index: {}]
  %s7 = inlined_call_operand.vmem [shape: f32[8,8], index: 7, kind: input, shape index: {}]
  %s8 = inlined_call_operand.vmem [shape: f32[8,1], index: 8, kind: input, shape index: {}]
  %s9 = inlined_call_operand.vmem [shape: f32[8,1], index: 9, kind: input, shape index: {}]
  %s10 = inlined_call_operand.vmem [shape: f32[2,8,256], index: 10, kind: output, shape index: {}]
  %s11 = sld [smem:[#allocation0]]
  $region73: #{postres_forward.1} parent=0
    _
  %s13 = ssub.s32 1, %s11
  %s14 = scalar_select 0, %s13, %s11
  loop: start=0, step=1, limit=4
  $region2: #{postres_forward.1} parent=0 // loop_pre_header
    _
  $region3: #{postres_forward.1} parent=0 // loop_header
    %s16 = sphi 0, %s20
    %p17 = scmp.ge.s32.totalorder %s16, 4
    %s26 = sphi 0, %s28
    %s29 = sphi 0, %s26
    %s30 = sphi 0, %s29
    %s46 = sphi 0, %s30
    %s50 = sphi 0, %s50
    %s52 = sphi 0, %s50
    %s53 = sphi 0, %s52
    %s67 = sphi 0, %s53
    %s71 = sphi 0, %s71
    %s73 = sphi 0, %s71
    %s74 = sphi 0, %s73
    %s88 = sphi 0, %s74
    %s92 = sphi 0, %s92
    %s94 = sphi 0, %s92
    %s95 = sphi 0, %s94
    %s109 = sphi 0, %s95
    %s113 = sphi 0, %s113
    %s115 = sphi 0, %s113
    %s116 = sphi 0, %s115
    %s130 = sphi 0, %s116
    %s134 = sphi 0, %s134
    %s136 = sphi 0, %s134
    %s137 = sphi 0, %s136
    %s151 = sphi 0, %s137
    %s155 = sphi 0, %s155
    %s157 = sphi 0, %s155
    %s158 = sphi 0, %s157
    %s172 = sphi 0, %s158
    %s176 = sphi 0, %s176
    %s178 = sphi 0, %s176
    %s179 = sphi 0, %s178
    %s193 = sphi 0, %s179
    %s197 = sphi 0, %s197
    %s199 = sphi 0, %s197
    %s200 = sphi 0, %s199
    %s214 = sphi 0, %s200
    %s218 = sphi 0, %s218
    %s220 = sphi 0, %s218
    %s221 = sphi 0, %s220
    %s235 = sphi 0, %s221
    %s241 = sphi 0, %s243
    %s244 = sphi 0, %s241
    %s245 = sphi 0, %s244
    %s261 = sphi 0, %s245
  $region4: #{postres_forward.1} parent=0 // loop_header_branch
    %19 = sbr.rel (%p17) target = $region8
  $region5: #{postres_forward.1} parent=0 // loop_body
    %s21 = ssub.s32 %s16, 1
    %s22 = ssub.s32 %s16, 2
    %s23 = sadd.s32 %s16, 1
    %s24 = ssub.s32 %s16, %s23
    %p25 = scmp.eq.s32.totalorder %s24, 0
    %s27 = sadd.s32 %s26, 1
    %s28 = scalar_select %p25, %s26, %s27
    %p31 = pneg %p25
    %p32 = scmp.eq.s32.totalorder %s16, 1
    %p33 = por %p31, %p32
    %p34 = scmp.ne.s32.totalorder %s26, %s29
    %p35 = scmp.eq.s32.totalorder %s16, 0
    %p36 = por %p34, %p35
    %p37 = scmp.ne.s32.totalorder %s26, %s29
    %p38 = scmp.eq.s32.totalorder %s21, 1
    %p39 = por %p37, %p38
    %p40 = scmp.ne.s32.totalorder %s29, %s30
    %p41 = scmp.eq.s32.totalorder %s21, 0
    %p42 = por %p40, %p41
    %p43 = scmp.ne.s32.totalorder %s29, %s30
    %p44 = scmp.eq.s32.totalorder %s22, 1
    %p45 = por %p43, %p44
    %p47 = scmp.ne.s32.totalorder %s30, %s46
    %p48 = scmp.eq.s32.totalorder %s22, 0
    %p49 = por %p47, %p48
    %s51 = sadd.s32 %s50, 1
    %p54 = scmp.eq.s32.totalorder %s16, 1
    %p55 = scmp.ne.s32.totalorder %s50, %s52
    %p56 = scmp.eq.s32.totalorder %s16, 0
    %p57 = por %p55, %p56
    %p58 = scmp.ne.s32.totalorder %s50, %s52
    %p59 = scmp.eq.s32.totalorder %s21, 1
    %p60 = por %p58, %p59
    %p61 = scmp.ne.s32.totalorder %s52, %s53
    %p62 = scmp.eq.s32.totalorder %s21, 0
    %p63 = por %p61, %p62
    %p64 = scmp.ne.s32.totalorder %s52, %s53
    %p65 = scmp.eq.s32.totalorder %s22, 1
    %p66 = por %p64, %p65
    %p68 = scmp.ne.s32.totalorder %s53, %s67
    %p69 = scmp.eq.s32.totalorder %s22, 0
    %p70 = por %p68, %p69
    %s72 = sadd.s32 %s71, 1
    %p75 = scmp.eq.s32.totalorder %s16, 1
    %p76 = scmp.ne.s32.totalorder %s71, %s73
    %p77 = scmp.eq.s32.totalorder %s16, 0
    %p78 = por %p76, %p77
    %p79 = scmp.ne.s32.totalorder %s71, %s73
    %p80 = scmp.eq.s32.totalorder %s21, 1
    %p81 = por %p79, %p80
    %p82 = scmp.ne.s32.totalorder %s73, %s74
    %p83 = scmp.eq.s32.totalorder %s21, 0
    %p84 = por %p82, %p83
    %p85 = scmp.ne.s32.totalorder %s73, %s74
    %p86 = scmp.eq.s32.totalorder %s22, 1
    %p87 = por %p85, %p86
    %p89 = scmp.ne.s32.totalorder %s74, %s88
    %p90 = scmp.eq.s32.totalorder %s22, 0
    %p91 = por %p89, %p90
    %s93 = sadd.s32 %s92, 1
    %p96 = scmp.eq.s32.totalorder %s16, 1
    %p97 = scmp.ne.s32.totalorder %s92, %s94
    %p98 = scmp.eq.s32.totalorder %s16, 0
    %p99 = por %p97, %p98
    %p100 = scmp.ne.s32.totalorder %s92, %s94
    %p101 = scmp.eq.s32.totalorder %s21, 1
    %p102 = por %p100, %p101
    %p103 = scmp.ne.s32.totalorder %s94, %s95
    %p104 = scmp.eq.s32.totalorder %s21, 0
    %p105 = por %p103, %p104
    %p106 = scmp.ne.s32.totalorder %s94, %s95
    %p107 = scmp.eq.s32.totalorder %s22, 1
    %p108 = por %p106, %p107
    %p110 = scmp.ne.s32.totalorder %s95, %s109
    %p111 = scmp.eq.s32.totalorder %s22, 0
    %p112 = por %p110, %p111
    %s114 = sadd.s32 %s113, 1
    %p117 = scmp.eq.s32.totalorder %s16, 1
    %p118 = scmp.ne.s32.totalorder %s113, %s115
    %p119 = scmp.eq.s32.totalorder %s16, 0
    %p120 = por %p118, %p119
    %p121 = scmp.ne.s32.totalorder %s113, %s115
    %p122 = scmp.eq.s32.totalorder %s21, 1
    %p123 = por %p121, %p122
    %p124 = scmp.ne.s32.totalorder %s115, %s116
    %p125 = scmp.eq.s32.totalorder %s21, 0
    %p126 = por %p124, %p125
    %p127 = scmp.ne.s32.totalorder %s115, %s116
    %p128 = scmp.eq.s32.totalorder %s22, 1
    %p129 = por %p127, %p128
    %p131 = scmp.ne.s32.totalorder %s116, %s130
    %p132 = scmp.eq.s32.totalorder %s22, 0
    %p133 = por %p131, %p132
    %s135 = sadd.s32 %s134, 1
    %p138 = scmp.eq.s32.totalorder %s16, 1
    %p139 = scmp.ne.s32.totalorder %s134, %s136
    %p140 = scmp.eq.s32.totalorder %s16, 0
    %p141 = por %p139, %p140
    %p142 = scmp.ne.s32.totalorder %s134, %s136
    %p143 = scmp.eq.s32.totalorder %s21, 1
    %p144 = por %p142, %p143
    %p145 = scmp.ne.s32.totalorder %s136, %s137
    %p146 = scmp.eq.s32.totalorder %s21, 0
    %p147 = por %p145, %p146
    %p148 = scmp.ne.s32.totalorder %s136, %s137
    %p149 = scmp.eq.s32.totalorder %s22, 1
    %p150 = por %p148, %p149
    %p152 = scmp.ne.s32.totalorder %s137, %s151
    %p153 = scmp.eq.s32.totalorder %s22, 0
    %p154 = por %p152, %p153
    %s156 = sadd.s32 %s155, 1
    %p159 = scmp.eq.s32.totalorder %s16, 1
    %p160 = scmp.ne.s32.totalorder %s155, %s157
    %p161 = scmp.eq.s32.totalorder %s16, 0
    %p162 = por %p160, %p161
    %p163 = scmp.ne.s32.totalorder %s155, %s157
    %p164 = scmp.eq.s32.totalorder %s21, 1
    %p165 = por %p163, %p164
    %p166 = scmp.ne.s32.totalorder %s157, %s158
    %p167 = scmp.eq.s32.totalorder %s21, 0
    %p168 = por %p166, %p167
    %p169 = scmp.ne.s32.totalorder %s157, %s158
    %p170 = scmp.eq.s32.totalorder %s22, 1
    %p171 = por %p169, %p170
    %p173 = scmp.ne.s32.totalorder %s158, %s172
    %p174 = scmp.eq.s32.totalorder %s22, 0
    %p175 = por %p173, %p174
    %s177 = sadd.s32 %s176, 1
    %p180 = scmp.eq.s32.totalorder %s16, 1
    %p181 = scmp.ne.s32.totalorder %s176, %s178
    %p182 = scmp.eq.s32.totalorder %s16, 0
    %p183 = por %p181, %p182
    %p184 = scmp.ne.s32.totalorder %s176, %s178
    %p185 = scmp.eq.s32.totalorder %s21, 1
    %p186 = por %p184, %p185
    %p187 = scmp.ne.s32.totalorder %s178, %s179
    %p188 = scmp.eq.s32.totalorder %s21, 0
    %p189 = por %p187, %p188
    %p190 = scmp.ne.s32.totalorder %s178, %s179
    %p191 = scmp.eq.s32.totalorder %s22, 1
    %p192 = por %p190, %p191
    %p194 = scmp.ne.s32.totalorder %s179, %s193
    %p195 = scmp.eq.s32.totalorder %s22, 0
    %p196 = por %p194, %p195
    %s198 = sadd.s32 %s197, 1
    %p201 = scmp.eq.s32.totalorder %s16, 1
    %p202 = scmp.ne.s32.totalorder %s197, %s199
    %p203 = scmp.eq.s32.totalorder %s16, 0
    %p204 = por %p202, %p203
    %p205 = scmp.ne.s32.totalorder %s197, %s199
    %p206 = scmp.eq.s32.totalorder %s21, 1
    %p207 = por %p205, %p206
    %p208 = scmp.ne.s32.totalorder %s199, %s200
    %p209 = scmp.eq.s32.totalorder %s21, 0
    %p210 = por %p208, %p209
    %p211 = scmp.ne.s32.totalorder %s199, %s200
    %p212 = scmp.eq.s32.totalorder %s22, 1
    %p213 = por %p211, %p212
    %p215 = scmp.ne.s32.totalorder %s200, %s214
    %p216 = scmp.eq.s32.totalorder %s22, 0
    %p217 = por %p215, %p216
    %s219 = sadd.s32 %s218, 1
    %p222 = scmp.eq.s32.totalorder %s16, 1
    %p223 = scmp.ne.s32.totalorder %s218, %s220
    %p224 = scmp.eq.s32.totalorder %s16, 0
    %p225 = por %p223, %p224
    %p226 = scmp.ne.s32.totalorder %s218, %s220
    %p227 = scmp.eq.s32.totalorder %s21, 1
    %p228 = por %p226, %p227
    %p229 = scmp.ne.s32.totalorder %s220, %s221
    %p230 = scmp.eq.s32.totalorder %s21, 0
    %p231 = por %p229, %p230
    %p232 = scmp.ne.s32.totalorder %s220, %s221
    %p233 = scmp.eq.s32.totalorder %s22, 1
    %p234 = por %p232, %p233
    %p236 = scmp.ne.s32.totalorder %s221, %s235
    %p237 = scmp.eq.s32.totalorder %s22, 0
    %p238 = por %p236, %p237
    %s239 = ssub.s32 %s16, %s23
    %p240 = scmp.eq.s32.totalorder %s239, 0
    %s242 = sadd.s32 %s241, 1
    %s243 = scalar_select %p240, %s241, %s242
    %p246 = pneg %p240
    %p247 = scmp.eq.s32.totalorder %s16, 1
    %p248 = por %p246, %p247
    %p249 = scmp.ne.s32.totalorder %s241, %s244
    %p250 = scmp.eq.s32.totalorder %s16, 0
    %p251 = por %p249, %p250
    %p252 = scmp.ne.s32.totalorder %s241, %s244
    %p253 = scmp.eq.s32.totalorder %s21, 1
    %p254 = por %p252, %p253
    %p255 = scmp.ne.s32.totalorder %s244, %s245
    %p256 = scmp.eq.s32.totalorder %s21, 0
    %p257 = por %p255, %p256
    %p258 = scmp.ne.s32.totalorder %s244, %s245
    %p259 = scmp.eq.s32.totalorder %s22, 1
    %p260 = por %p258, %p259
    %p262 = scmp.ne.s32.totalorder %s245, %s261
    %p263 = scmp.eq.s32.totalorder %s22, 0
    %p264 = por %p262, %p263
    %p265 = scmp.le.s32.totalorder 1, %s16
    %p266 = scmp.lt.s32.totalorder %s16, 3
    %p267 = pnand %p265, %p266
    %p268 = pneg %p267
    // Predicated region
    $region9: #{postres_forward.1} parent=5 // pred_check
      _
    $region10: #{postres_forward.1} parent=5 // pred_check_branch
      %270 = sbr.rel (%p267) target = $region12
    $region11: #{postres_forward.1} parent=5 // pred_region
      %s271 = ssub.s32 %s16, 1
      // Predicated region
      $region13: #{postres_forward.1} parent=11 // pred_check
        %p272 = pneg %p63
      $region14: #{postres_forward.1} parent=11 // pred_check_branch
        %274 = sbr.rel (%p272) target = $region16
      $region15: #{postres_forward.1} parent=11 // pred_region
        _
      $region16: #{postres_forward.1} parent=11 // pred_fallthru
        _
      // Predicated region
      $region17: #{postres_forward.1} parent=11 // pred_check
        %p275 = pneg %p84
      $region18: #{postres_forward.1} parent=11 // pred_check_branch
        %277 = sbr.rel (%p275) target = $region20
      $region19: #{postres_forward.1} parent=11 // pred_region
        _
      $region20: #{postres_forward.1} parent=11 // pred_fallthru
        _
      // Predicated region
      $region21: #{postres_forward.1} parent=11 // pred_check
        %p278 = pneg %p105
      $region22: #{postres_forward.1} parent=11 // pred_check_branch
        %280 = sbr.rel (%p278) target = $region24
      $region23: #{postres_forward.1} parent=11 // pred_region
        _
      $region24: #{postres_forward.1} parent=11 // pred_fallthru
        _
      // Predicated region
      $region25: #{postres_forward.1} parent=11 // pred_check
        %p281 = pneg %p126
      $region26: #{postres_forward.1} parent=11 // pred_check_branch
        %283 = sbr.rel (%p281) target = $region28
      $region27: #{postres_forward.1} parent=11 // pred_region
        _
      $region28: #{postres_forward.1} parent=11 // pred_fallthru
        _
      // Predicated region
      $region29: #{postres_forward.1} parent=11 // pred_check
        %p284 = pneg %p147
      $region30: #{postres_forward.1} parent=11 // pred_check_branch
        %286 = sbr.rel (%p284) target = $region32
      $region31: #{postres_forward.1} parent=11 // pred_region
        _
      $region32: #{postres_forward.1} parent=11 // pred_fallthru
        _
      // Predicated region
      $region33: #{postres_forward.1} parent=11 // pred_check
        %p287 = pneg %p168
      $region34: #{postres_forward.1} parent=11 // pred_check_branch
        %289 = sbr.rel (%p287) target = $region36
      $region35: #{postres_forward.1} parent=11 // pred_region
        _
      $region36: #{postres_forward.1} parent=11 // pred_fallthru
        _
      // Predicated region
      $region37: #{postres_forward.1} parent=11 // pred_check
        %p290 = pneg %p189
      $region38: #{postres_forward.1} parent=11 // pred_check_branch
        %292 = sbr.rel (%p290) target = $region40
      $region39: #{postres_forward.1} parent=11 // pred_region
        _
      $region40: #{postres_forward.1} parent=11 // pred_fallthru
        _
      // Predicated region
      $region41: #{postres_forward.1} parent=11 // pred_check
        %p293 = pneg %p210
      $region42: #{postres_forward.1} parent=11 // pred_check_branch
        %295 = sbr.rel (%p293) target = $region44
      $region43: #{postres_forward.1} parent=11 // pred_region
        _
      $region44: #{postres_forward.1} parent=11 // pred_fallthru
        _
      // Predicated region
      $region45: #{postres_forward.1} parent=11 // pred_check
        %p296 = pneg %p231
      $region46: #{postres_forward.1} parent=11 // pred_check_branch
        %298 = sbr.rel (%p296) target = $region48
      $region47: #{postres_forward.1} parent=11 // pred_region
        _
      $region48: #{postres_forward.1} parent=11 // pred_fallthru
        _
    $region12: #{postres_forward.1} parent=5 // pred_fallthru
      _
    %p299 = scmp.lt.s32.totalorder %s16, 2
    // Predicated region
    $region49: #{postres_forward.1} parent=5 // pred_check
      %p300 = pneg %p299
    $region50: #{postres_forward.1} parent=5 // pred_check_branch
      %302 = sbr.rel (%p300) target = $region52
    $region51: #{postres_forward.1} parent=5 // pred_region
      // Predicated region
      $region53: #{postres_forward.1} parent=51 // pred_check
        %p303 = pneg %p36
      $region54: #{postres_forward.1} parent=51 // pred_check_branch
        %305 = sbr.rel (%p303) target = $region56
      $region55: #{postres_forward.1} parent=51 // pred_region
        %p306 = scmp.lt.s32.totalorder %s16, 1
        %s307 = scalar_select %p306, %s16, 1
        %s308 = smul.addr %s307, 2
        %s309 = smul.addr %s308, 4
        %s310 = scalar_lea.vmem %s0, %s309
      $region56: #{postres_forward.1} parent=51 // pred_fallthru
        _
    $region52: #{postres_forward.1} parent=5 // pred_fallthru
      _
    %p311 = scmp.le.s32.totalorder 1, %s16
    %p312 = scmp.lt.s32.totalorder %s16, 3
    %p313 = pnand %p311, %p312
    %p314 = pneg %p313
    // Predicated region
    $region57: #{postres_forward.1} parent=5 // pred_check
      _
    $region58: #{postres_forward.1} parent=5 // pred_check_branch
      %316 = sbr.rel (%p313) target = $region60
    $region59: #{postres_forward.1} parent=5 // pred_region
      %s317 = ssub.s32 %s16, 1
      %p318 = scmp.lt.s32.totalorder %s21, 1
      %s319 = scalar_select %p318, %s21, 1
      %s320 = smul.addr %s319, 2
      %s321 = smul.addr %s320, 4
      %s322 = scalar_lea.vmem %s0, %s321
      %p323 = pneg %p42
      %p324 = pneg %p39
      %p325 = pneg %p63
      %p326 = pneg %p60
      %p327 = pneg %p84
      %p328 = pneg %p81
      %p329 = pneg %p105
      %p330 = pneg %p102
      %p331 = pneg %p126
      %p332 = pneg %p123
      %p333 = pneg %p147
      %p334 = pneg %p144
      %p335 = pneg %p168
      %p336 = pneg %p165
      %p337 = pneg %p189
      %p338 = pneg %p186
      %p339 = pneg %p210
      %p340 = pneg %p207
      %p341 = pneg %p231
      %p342 = pneg %p228
      %p343 = pneg %p257
      %p344 = pneg %p254
      %p345 = scmp.lt.s32.totalorder %s21, 1
      %s346 = scalar_select %p345, %s21, 1
      %s347 = smul.addr %s346, 2
      %s348 = smul.addr %s347, 8
      %s349 = scalar_lea.vmem %s10, %s348
      %p350 = scmp.lt.s32.totalorder %s21, 1
      %s351 = scalar_select %p350, %s21, 1
      %s352 = smul.addr %s351, 2
      %s353 = smul.addr %s352, 4
      %s354 = scalar_lea.vmem %s0, %s353
      %p355 = scmp.lt.s32.totalorder %s21, 1
      %s356 = scalar_select %p355, %s21, 1
      %s357 = smul.addr %s356, 2
      %s358 = smul.addr %s357, 8
      %s359 = scalar_lea.vmem %s10, %s358
      %v361 = vld [vmem:[%s354] sm:$0xff]
      %v363 = vcombine.high %v361, %v361
      %vm365 = vcmask 1043456
      %v366 = vsel %vm365, %v361, 0.0
      %v367 = vsel %vm365, %v363, 0.0
      %v368 = vlaneseq
      %v369 = vand.u32 %v368, 127
      %v370 = vadd.s32 %v369, 128
      %v371 = vand.u32 %v369, 15
      %v372 = vand.u32 %v370, 15
      %vm373 = vcmp.ge.s32.totalorder %v369, 16
      %vm374 = vcmp.ge.s32.totalorder %v370, 16
      %vm375 = vcmp.ge.s32.totalorder %v371, 1
      %vm376 = vcmp.ge.s32.totalorder %v372, 1
      %vm377 = vmand %vm373, %vm375
      %vm378 = vmand %vm374, %vm376
      %v379 = vsel %vm377, 1, 0
      %v380 = vsel %vm378, 1, 0
      %v381 = vcvt.s32.f32 %v379
      %v382 = vcvt.s32.f32 %v380
      %v383 = vsel %vm373, 1, 0
      %v384 = vsel %vm374, 1, 0
      %v385 = vcvt.s32.f32 %v383
      %v386 = vcvt.s32.f32 %v384
      %vm387 = vcmp.lt.s32.totalorder %v371, 15
      %vm388 = vcmp.lt.s32.totalorder %v372, 15
      %vm389 = vmand %vm373, %vm387
      %vm390 = vmand %vm374, %vm388
      %v391 = vsel %vm389, 1, 0
      %v392 = vsel %vm390, 1, 0
      %v393 = vcvt.s32.f32 %v391
      %v394 = vcvt.s32.f32 %v392
      %v395 = vsel %vm375, 1, 0
      %v396 = vsel %vm376, 1, 0
      %v397 = vcvt.s32.f32 %v395
      %v398 = vcvt.s32.f32 %v396
      %v399 = vsel %vm387, 1, 0
      %v400 = vsel %vm388, 1, 0
      %v401 = vcvt.s32.f32 %v399
      %v402 = vcvt.s32.f32 %v400
      %vm403 = vcmp.lt.s32.totalorder %v369, 240
      %vm404 = vcmp.lt.s32.totalorder %v370, 240
      %vm405 = vmand %vm403, %vm375
      %vm406 = vmand %vm404, %vm376
      %v407 = vsel %vm405, 1, 0
      %v408 = vsel %vm406, 1, 0
      %v409 = vcvt.s32.f32 %v407
      %v410 = vcvt.s32.f32 %v408
      %v411 = vsel %vm403, 1, 0
      %v412 = vsel %vm404, 1, 0
      %v413 = vcvt.s32.f32 %v411
      %v414 = vcvt.s32.f32 %v412
      %vm415 = vmand %vm403, %vm387
      %vm416 = vmand %vm404, %vm388
      %v417 = vsel %vm415, 1, 0
      %v418 = vsel %vm416, 1, 0
      %v419 = vcvt.s32.f32 %v417
      %v420 = vcvt.s32.f32 %v418
      %421 = vrot.lane.b32.xlu0 %v366, 17
      %v422 = vpop.permute.xlu0 %421
      %423 = vrot.lane.b32.xlu0 %v367, 17
      %v424 = vpop.permute.xlu0 %423
      %vm425 = vcmp.lt.s32.totalorder %v369, 17
      %v426 = vsel %vm425, %v422, %v424
      %v427 = vsel %vm425, %v424, %v422
      %v428 = vmul.f32 %v427, %v381
      %v429 = vmul.f32 %v426, %v382
      %430 = vrot.lane.b32.xlu0 %v366, 16
      %v431 = vpop.permute.xlu0 %430
      %432 = vrot.lane.b32.xlu0 %v367, 16
      %v433 = vpop.permute.xlu0 %432
      %vm434 = vcmp.lt.s32.totalorder %v369, 16
      %v435 = vsel %vm434, %v431, %v433
      %v436 = vsel %vm434, %v433, %v431
      %v437 = vmul.f32 %v436, %v385
      %v438 = vmul.f32 %v435, %v386
      %439 = vrot.lane.b32.xlu0 %v366, 15
      %v440 = vpop.permute.xlu0 %439
      %441 = vrot.lane.b32.xlu0 %v367, 15
      %v442 = vpop.permute.xlu0 %441
      %vm443 = vcmp.lt.s32.totalorder %v369, 15
      %v444 = vsel %vm443, %v440, %v442
      %v445 = vsel %vm443, %v442, %v440
      %v446 = vmul.f32 %v445, %v393
      %v447 = vmul.f32 %v444, %v394
      %448 = vrot.lane.b32.xlu0 %v366, 1
      %v449 = vpop.permute.xlu0 %448
      %450 = vrot.lane.b32.xlu0 %v367, 1
      %v451 = vpop.permute.xlu0 %450
      %vm452 = vcmp.lt.s32.totalorder %v369, 1
      %v453 = vsel %vm452, %v449, %v451
      %v454 = vsel %vm452, %v451, %v449
      %v455 = vmul.f32 %v454, %v397
      %v456 = vmul.f32 %v453, %v398
      %457 = vrot.lane.b32.xlu0 %v366, 127
      %v458 = vpop.permute.xlu0 %457
      %459 = vrot.lane.b32.xlu0 %v367, 127
      %v460 = vpop.permute.xlu0 %459
      %vm461 = vcmp.lt.s32.totalorder %v369, 127
      %v462 = vsel %vm461, %v458, %v460
      %v463 = vsel %vm461, %v460, %v458
      %v464 = vmul.f32 %v462, %v401
      %v465 = vmul.f32 %v463, %v402
      %466 = vrot.lane.b32.xlu0 %v366, 113
      %v467 = vpop.permute.xlu0 %466
      %468 = vrot.lane.b32.xlu0 %v367, 113
      %v469 = vpop.permute.xlu0 %468
      %vm470 = vcmp.lt.s32.totalorder %v369, 113
      %v471 = vsel %vm470, %v467, %v469
      %v472 = vsel %vm470, %v469, %v467
      %v473 = vmul.f32 %v471, %v409
      %v474 = vmul.f32 %v472, %v410
      %475 = vrot.lane.b32.xlu0 %v366, 112
      %v476 = vpop.permute.xlu0 %475
      %477 = vrot.lane.b32.xlu0 %v367, 112
      %v478 = vpop.permute.xlu0 %477
      %vm479 = vcmp.lt.s32.totalorder %v369, 112
      %v480 = vsel %vm479, %v476, %v478
      %v481 = vsel %vm479, %v478, %v476
      %v482 = vmul.f32 %v480, %v413
      %v483 = vmul.f32 %v481, %v414
      %484 = vrot.lane.b32.xlu0 %v366, 111
      %v485 = vpop.permute.xlu0 %484
      %486 = vrot.lane.b32.xlu0 %v367, 111
      %v487 = vpop.permute.xlu0 %486
      %vm488 = vcmp.lt.s32.totalorder %v369, 111
      %v489 = vsel %vm488, %v485, %v487
      %v490 = vsel %vm488, %v487, %v485
      %v491 = vmul.f32 %v489, %v419
      %v492 = vmul.f32 %v490, %v420
      %v493 = vpack.c.bf16 %v437, %v428
      %v494 = vpack.c.bf16 %v438, %v429
      %v495 = vpack.c.bf16 %v455, %v446
      %v496 = vpack.c.bf16 %v456, %v447
      %v497 = vpack.c.bf16 %v464, %v366
      %v498 = vpack.c.bf16 %v465, %v367
      %v499 = vpack.c.bf16 %v482, %v473
      %v500 = vpack.c.bf16 %v483, %v474
      %v501 = vpack.c.bf16 0.0, %v491
      %v502 = vpack.c.bf16 0.0, %v492
      %v503 = vpack.c.bf16 0.0, 0.0
      %v504 = vld [vmem:[%s1] sm:$0xf]
      %505 = vmatprep.subr.bf16.mxu0 %v503
      %506 = vmatpush1.bf16.msra.mxu0 %v503
      %507 = vmatprep.subr.bf16.mxu0 %v503
      %508 = vmatpush1.bf16.msra.mxu0 %v503
      %509 = vmatprep.subr.bf16.mxu0 %v503
      %510 = vmatpush1.bf16.msra.mxu0 %v503
      %511 = vmatprep.subr.bf16.mxu0 %v502
      %512 = vmatpush1.bf16.msra.mxu0 %v501
      %513 = vmatprep.subr.bf16.mxu0 %v500
      %514 = vmatpush1.bf16.msra.mxu0 %v499
      %515 = vmatprep.subr.bf16.mxu0 %v498
      %516 = vmatpush1.bf16.msra.mxu0 %v497
      %517 = vmatprep.subr.bf16.mxu0 %v496
      %518 = vmatpush1.bf16.msra.mxu0 %v495
      %519 = vmatprep.subr.bf16.mxu0 %v494
      %520 = vmatpush1.bf16.msra.mxu0 %v493
      %521 = vmatprep.subr.bf16.mxu0 0
      %522 = vmatpush2.bf16.msra.mxu0 0
      %523 = vmatprep.subr.bf16.mxu0 0
      %524 = vmatpush2.bf16.msra.mxu0 0
      %525 = vmatprep.subr.bf16.mxu0 0
      %526 = vmatpush2.bf16.msra.mxu0 0
      %527 = vmatprep.subr.bf16.mxu0 0
      %528 = vmatpush2.bf16.msra.mxu0 0
      %529 = vmatprep.subr.bf16.mxu0 0
      %530 = vmatpush2.bf16.msra.mxu0 0
      %531 = vmatprep.subr.bf16.mxu0 0
      %532 = vmatpush2.bf16.msra.mxu0 0
      %533 = vmatprep.subr.bf16.mxu0 0
      %534 = vmatpush2.bf16.msra.mxu0 0
      %535 = vmatprep.subr.bf16.mxu0 0
      %536 = vmatpush2.bf16.msra.mxu0 0
      %537 = vmatprep.mubr.bf16.mxu0 0
      %538 = vmatmul.mubr.bf16.gmra.mxu0 %v504
      %v539 = vpop.f32.mrf.mxu0
      %v540 = vadd.f32 0.0, %v539
      %v541 = vpop.f32.mrf.mxu0
      %v542 = vadd.f32 0.0, %v541
      %v543 = vpop.f32.mrf.mxu0
      %v544 = vpop.f32.mrf.mxu0
      %545 = vdwg.mxu0
      %v546 = vadd.f32 %v540, %v542
      %547 = vadd.xlane.f32.xlu0 %v546
      %v548 = vpop.xlane.xlu0 %547
      %v549 = vmul.f32 %v548, 0.00390625
      %v550 = vsub.f32 %v540, %v549
      %v551 = vsub.f32 %v542, %v549
      %v552 = vmul.f32 %v550, %v550
      %v553 = vmul.f32 %v551, %v551
      %v554 = vadd.f32 %v552, %v553
      %555 = vadd.xlane.f32.xlu0 %v554
      %v556 = vpop.xlane.xlu0 %555
      %v557 = vld [vmem:[%s2] sm:$0xff]
      %v558 = vmul.f32 %v556, 0.00390625
      %v559 = vadd.f32 %v558, 1e-05
      %v560 = vrsqrt.pop %v559
      %v561 = vmul.f32 %v557, %v560
      %563 = vset.pattern.permute.xlu0 0
      %564 = vperm.xlu0 %563, %v561
      %v565 = vpop.permute.xlu0 %564
      %v567 = vmul.f32 %v550, %v565
      %v568 = vmul.f32 %v551, %v565
      %v569 = vld [vmem:[%s3] sm:$0xff]
      %571 = vset.pattern.permute.xlu0 0
      %572 = vperm.xlu0 %571, %v569
      %v573 = vpop.permute.xlu0 %572
      %v575 = vadd.f32 %v567, %v573
      %v576 = vadd.f32 %v568, %v573
      %v577 = vmax.f32 %v575, 0.0
      %v578 = vmax.f32 %v576, 0.0
      %579 = vrot.lane.b32.xlu0 %v577, 17
      %v580 = vpop.permute.xlu0 %579
      %581 = vrot.lane.b32.xlu0 %v578, 17
      %v582 = vpop.permute.xlu0 %581
      %v583 = vsel %vm425, %v580, %v582
      %v584 = vsel %vm425, %v582, %v580
      %v585 = vmul.f32 %v584, %v381
      %v586 = vmul.f32 %v583, %v382
      %587 = vrot.lane.b32.xlu0 %v577, 16
      %v588 = vpop.permute.xlu0 %587
      %589 = vrot.lane.b32.xlu0 %v578, 16
      %v590 = vpop.permute.xlu0 %589
      %v591 = vsel %vm434, %v588, %v590
      %v592 = vsel %vm434, %v590, %v588
      %v593 = vmul.f32 %v592, %v385
      %v594 = vmul.f32 %v591, %v386
      %595 = vrot.lane.b32.xlu0 %v577, 15
      %v596 = vpop.permute.xlu0 %595
      %597 = vrot.lane.b32.xlu0 %v578, 15
      %v598 = vpop.permute.xlu0 %597
      %v599 = vsel %vm443, %v596, %v598
      %v600 = vsel %vm443, %v598, %v596
      %v601 = vmul.f32 %v600, %v393
      %v602 = vmul.f32 %v599, %v394
      %603 = vrot.lane.b32.xlu0 %v577, 1
      %v604 = vpop.permute.xlu0 %603
      %605 = vrot.lane.b32.xlu0 %v578, 1
      %v606 = vpop.permute.xlu0 %605
      %v607 = vsel %vm452, %v604, %v606
      %v608 = vsel %vm452, %v606, %v604
      %v609 = vmul.f32 %v608, %v397
      %v610 = vmul.f32 %v607, %v398
      %611 = vrot.lane.b32.xlu0 %v577, 127
      %v612 = vpop.permute.xlu0 %611
      %613 = vrot.lane.b32.xlu0 %v578, 127
      %v614 = vpop.permute.xlu0 %613
      %v615 = vsel %vm461, %v612, %v614
      %v616 = vsel %vm461, %v614, %v612
      %v617 = vmul.f32 %v615, %v401
      %v618 = vmul.f32 %v616, %v402
      %619 = vrot.lane.b32.xlu0 %v577, 113
      %v620 = vpop.permute.xlu0 %619
      %621 = vrot.lane.b32.xlu0 %v578, 113
      %v622 = vpop.permute.xlu0 %621
      %v623 = vsel %vm470, %v620, %v622
      %v624 = vsel %vm470, %v622, %v620
      %v625 = vmul.f32 %v623, %v409
      %v626 = vmul.f32 %v624, %v410
      %627 = vrot.lane.b32.xlu0 %v577, 112
      %v628 = vpop.permute.xlu0 %627
      %629 = vrot.lane.b32.xlu0 %v578, 112
      %v630 = vpop.permute.xlu0 %629
      %v631 = vsel %vm479, %v628, %v630
      %v632 = vsel %vm479, %v630, %v628
      %v633 = vmul.f32 %v631, %v413
      %v634 = vmul.f32 %v632, %v414
      %635 = vrot.lane.b32.xlu0 %v577, 111
      %v636 = vpop.permute.xlu0 %635
      %637 = vrot.lane.b32.xlu0 %v578, 111
      %v638 = vpop.permute.xlu0 %637
      %v639 = vsel %vm488, %v636, %v638
      %v640 = vsel %vm488, %v638, %v636
      %v641 = vmul.f32 %v639, %v419
      %v642 = vmul.f32 %v640, %v420
      %v643 = vpack.c.bf16 %v593, %v585
      %v644 = vpack.c.bf16 %v594, %v586
      %v645 = vpack.c.bf16 %v609, %v601
      %v646 = vpack.c.bf16 %v610, %v602
      %v647 = vpack.c.bf16 %v617, %v577
      %v648 = vpack.c.bf16 %v618, %v578
      %v649 = vpack.c.bf16 %v633, %v625
      %v650 = vpack.c.bf16 %v634, %v626
      %v651 = vpack.c.bf16 0.0, %v641
      %v652 = vpack.c.bf16 0.0, %v642
      %v653 = vld [vmem:[%s4] sm:$0xf]
      %654 = vmatprep.subr.bf16.mxu0 %v503
      %655 = vmatpush1.bf16.msra.mxu0 %v503
      %656 = vmatprep.subr.bf16.mxu0 %v503
      %657 = vmatpush1.bf16.msra.mxu0 %v503
      %658 = vmatprep.subr.bf16.mxu0 %v503
      %659 = vmatpush1.bf16.msra.mxu0 %v503
      %660 = vmatprep.subr.bf16.mxu0 %v652
      %661 = vmatpush1.bf16.msra.mxu0 %v651
      %662 = vmatprep.subr.bf16.mxu0 %v650
      %663 = vmatpush1.bf16.msra.mxu0 %v649
      %664 = vmatprep.subr.bf16.mxu0 %v648
      %665 = vmatpush1.bf16.msra.mxu0 %v647
      %666 = vmatprep.subr.bf16.mxu0 %v646
      %667 = vmatpush1.bf16.msra.mxu0 %v645
      %668 = vmatprep.subr.bf16.mxu0 %v644
      %669 = vmatpush1.bf16.msra.mxu0 %v643
      %670 = vmatprep.subr.bf16.mxu0 0
      %671 = vmatpush2.bf16.msra.mxu0 0
      %672 = vmatprep.subr.bf16.mxu0 0
      %673 = vmatpush2.bf16.msra.mxu0 0
      %674 = vmatprep.subr.bf16.mxu0 0
      %675 = vmatpush2.bf16.msra.mxu0 0
      %676 = vmatprep.subr.bf16.mxu0 0
      %677 = vmatpush2.bf16.msra.mxu0 0
      %678 = vmatprep.subr.bf16.mxu0 0
      %679 = vmatpush2.bf16.msra.mxu0 0
      %680 = vmatprep.subr.bf16.mxu0 0
      %681 = vmatpush2.bf16.msra.mxu0 0
      %682 = vmatprep.subr.bf16.mxu0 0
      %683 = vmatpush2.bf16.msra.mxu0 0
      %684 = vmatprep.subr.bf16.mxu0 0
      %685 = vmatpush2.bf16.msra.mxu0 0
      %686 = vmatprep.mubr.bf16.mxu0 0
      %687 = vmatmul.mubr.bf16.gmra.mxu0 %v653
      %v688 = vpop.f32.mrf.mxu0
      %v689 = vadd.f32 0.0, %v688
      %v690 = vpop.f32.mrf.mxu0
      %v691 = vadd.f32 0.0, %v690
      %v692 = vpop.f32.mrf.mxu0
      %v693 = vpop.f32.mrf.mxu0
      %694 = vdwg.mxu0
      %v695 = vadd.f32 %v689, %v691
      %696 = vadd.xlane.f32.xlu0 %v695
      %v697 = vpop.xlane.xlu0 %696
      %v698 = vmul.f32 %v697, 0.00390625
      %v699 = vsub.f32 %v689, %v698
      %v700 = vsub.f32 %v691, %v698
      %v701 = vmul.f32 %v699, %v699
      %v702 = vmul.f32 %v700, %v700
      %v703 = vadd.f32 %v701, %v702
      %704 = vadd.xlane.f32.xlu0 %v703
      %v705 = vpop.xlane.xlu0 %704
      %v706 = vld [vmem:[%s5] sm:$0xff]
      %v707 = vmul.f32 %v705, 0.00390625
      %v708 = vadd.f32 %v707, 1e-05
      %v709 = vrsqrt.pop %v708
      %v710 = vmul.f32 %v706, %v709
      %712 = vset.pattern.permute.xlu0 0
      %713 = vperm.xlu0 %712, %v710
      %v714 = vpop.permute.xlu0 %713
      %v716 = vmul.f32 %v699, %v714
      %v717 = vmul.f32 %v700, %v714
      %v718 = vld [vmem:[%s6] sm:$0xff]
      %720 = vset.pattern.permute.xlu0 0
      %721 = vperm.xlu0 %720, %v718
      %v722 = vpop.permute.xlu0 %721
      %v724 = vadd.f32 %v716, %v722
      %v725 = vadd.f32 %v717, %v722
      %v726 = vld [vmem:[%s7] sm:$0xff]
      %vm727 = vcmask 64512
      %v729 = vsel %vm727, %v726, 0
      %731 = vmatprep.subr.mxu0 0.0
      %732 = vmatpush1.msra.mxu0 0.0
      %733 = vmatprep.subr.mxu0 0.0
      %734 = vmatpush1.msra.mxu0 0.0
      %735 = vmatprep.subr.mxu0 0.0
      %736 = vmatpush1.msra.mxu0 0.0
      %737 = vmatprep.subr.mxu0 0.0
      %738 = vmatpush1.msra.mxu0 0.0
      %739 = vmatprep.subr.mxu0 0.0
      %740 = vmatpush1.msra.mxu0 0.0
      %741 = vmatprep.subr.mxu0 0.0
      %742 = vmatpush1.msra.mxu0 0.0
      %743 = vmatprep.subr.mxu0 0.0
      %744 = vmatpush1.msra.mxu0 0.0
      %745 = vmatprep.subr.mxu0 0.0
      %746 = vmatpush1.msra.mxu0 0.0
      %747 = vmatprep.subr.mxu0 0.0
      %748 = vmatpush1.msra.mxu0 0.0
      %749 = vmatprep.subr.mxu0 0.0
      %750 = vmatpush1.msra.mxu0 0.0
      %751 = vmatprep.subr.mxu0 0.0
      %752 = vmatpush1.msra.mxu0 0.0
      %753 = vmatprep.subr.mxu0 0.0
      %754 = vmatpush1.msra.mxu0 0.0
      %755 = vmatprep.subr.mxu0 0.0
      %756 = vmatpush1.msra.mxu0 0.0
      %757 = vmatprep.subr.mxu0 0.0
      %758 = vmatpush1.msra.mxu0 0.0
      %759 = vmatprep.subr.mxu0 0.0
      %760 = vmatpush1.msra.mxu0 0.0
      %761 = vmatprep.subr.mxu0 %v367
      %762 = vmatpush1.msra.mxu0 %v366
      %763 = vmatprep.subr.mxu0 0.0
      %764 = vmatpush2.msra.mxu0 0.0
      %765 = vmatprep.subr.mxu0 0.0
      %766 = vmatpush2.msra.mxu0 0.0
      %767 = vmatprep.subr.mxu0 0.0
      %768 = vmatpush2.msra.mxu0 0.0
      %769 = vmatprep.subr.mxu0 0.0
      %770 = vmatpush2.msra.mxu0 0.0
      %771 = vmatprep.subr.mxu0 0.0
      %772 = vmatpush2.msra.mxu0 0.0
      %773 = vmatprep.subr.mxu0 0.0
      %774 = vmatpush2.msra.mxu0 0.0
      %775 = vmatprep.subr.mxu0 0.0
      %776 = vmatpush2.msra.mxu0 0.0
      %777 = vmatprep.subr.mxu0 0.0
      %778 = vmatpush2.msra.mxu0 0.0
      %779 = vmatprep.subr.mxu0 0.0
      %780 = vmatpush2.msra.mxu0 0.0
      %781 = vmatprep.subr.mxu0 0.0
      %782 = vmatpush2.msra.mxu0 0.0
      %783 = vmatprep.subr.mxu0 0.0
      %784 = vmatpush2.msra.mxu0 0.0
      %785 = vmatprep.subr.mxu0 0.0
      %786 = vmatpush2.msra.mxu0 0.0
      %787 = vmatprep.subr.mxu0 0.0
      %788 = vmatpush2.msra.mxu0 0.0
      %789 = vmatprep.subr.mxu0 0.0
      %790 = vmatpush2.msra.mxu0 0.0
      %791 = vmatprep.subr.mxu0 0.0
      %792 = vmatpush2.msra.mxu0 0.0
      %793 = vmatprep.subr.mxu0 0.0
      %794 = vmatpush2.msra.mxu0 0.0
      %795 = vmatprep.mubr.f32.mxu0 0.0
      %796 = vmatmul.mubr.f32.gmra.mxu0 %v729
      %v797 = vpop.f32.mrf.mxu0
      %v798 = vadd.f32 0.0, %v797
      %v799 = vpop.f32.mrf.mxu0
      %v800 = vadd.f32 0.0, %v799
      %801 = vdwg.mxu0
      %v802 = vadd.f32 %v798, %v800
      %803 = vadd.xlane.f32.xlu0 %v802
      %v804 = vpop.xlane.xlu0 %803
      %v805 = vmul.f32 %v804, 0.00390625
      %v806 = vsub.f32 %v798, %v805
      %v807 = vsub.f32 %v800, %v805
      %v808 = vmul.f32 %v806, %v806
      %v809 = vmul.f32 %v807, %v807
      %v810 = vadd.f32 %v808, %v809
      %811 = vadd.xlane.f32.xlu0 %v810
      %v812 = vpop.xlane.xlu0 %811
      %v813 = vld [vmem:[%s8] sm:$0xff]
      %v814 = vmul.f32 %v812, 0.00390625
      %v815 = vadd.f32 %v814, 1e-05
      %v816 = vrsqrt.pop %v815
      %v817 = vmul.f32 %v813, %v816
      %819 = vset.pattern.permute.xlu0 0
      %820 = vperm.xlu0 %819, %v817
      %v821 = vpop.permute.xlu0 %820
      %v823 = vmul.f32 %v806, %v821
      %v824 = vmul.f32 %v807, %v821
      %v825 = vld [vmem:[%s9] sm:$0xff]
      %827 = vset.pattern.permute.xlu0 0
      %828 = vperm.xlu0 %827, %v825
      %v829 = vpop.permute.xlu0 %828
      %v831 = vadd.f32 %v823, %v829
      %v832 = vadd.f32 %v824, %v829
      %v833 = vadd.f32 %v724, %v831
      %v834 = vadd.f32 %v725, %v832
      %v835 = vmax.f32 %v833, 0.0
      %v836 = vmax.f32 %v834, 0.0
      %837 = vst [vmem:[%s359] sm:$0xff] %v835
      %838 = vst [vmem:[%s359 + $0x8] sm:$0xff] %v836
      %p839 = scmp.lt.s32.totalorder %s21, 1
      %s840 = scalar_select %p839, %s21, 1
      %s841 = smul.addr %s840, 2
      %s842 = smul.addr %s841, 8
      %s843 = scalar_lea.vmem %s10, %s842
      // Predicated region
      $region61: #{postres_forward.1} parent=59 // pred_check
        %p844 = pneg %p254
      $region62: #{postres_forward.1} parent=59 // pred_check_branch
        %846 = sbr.rel (%p844) target = $region64
      $region63: #{postres_forward.1} parent=59 // pred_region
        _
      $region64: #{postres_forward.1} parent=59 // pred_fallthru
        _
    $region60: #{postres_forward.1} parent=5 // pred_fallthru
      _
    %p847 = scmp.le.s32.totalorder 2, %s16
    // Predicated region
    $region65: #{postres_forward.1} parent=5 // pred_check
      %p848 = pneg %p847
    $region66: #{postres_forward.1} parent=5 // pred_check_branch
      %850 = sbr.rel (%p848) target = $region68
    $region67: #{postres_forward.1} parent=5 // pred_region
      %s851 = ssub.s32 %s16, 2
      // Predicated region
      $region69: #{postres_forward.1} parent=67 // pred_check
        %p852 = pneg %p260
      $region70: #{postres_forward.1} parent=67 // pred_check_branch
        %854 = sbr.rel (%p852) target = $region72
      $region71: #{postres_forward.1} parent=67 // pred_region
        %p855 = scmp.lt.s32.totalorder %s22, 1
        %s856 = scalar_select %p855, %s22, 1
        %s857 = smul.addr %s856, 2
        %s858 = smul.addr %s857, 8
        %s859 = scalar_lea.vmem %s10, %s858
      $region72: #{postres_forward.1} parent=67 // pred_fallthru
        _
    $region68: #{postres_forward.1} parent=5 // pred_fallthru
      _
  $region6: #{postres_forward.1} parent=0 // loop_footer
    %s20 = sadd.s32 1, %s16
  $region7: #{postres_forward.1} parent=0 // loop_footer_branch
    %15 = sbr.rel target = $region3
  $region8: #{postres_forward.1} parent=0 // loop_exit
    _

</llo_original>
